<compile_context>
chip_gen: v5e
topology: v5e:2x2
jax: 0.10.0
libtpu: 0.0.40
codegen_flags: <defaults>
</compile_context>

<pallas_src>
import functools

import jax
import jax.numpy as jnp
from jax import lax
from jax.experimental import pallas as pl
from jax.experimental.pallas import tpu as pltpu


def _choose_spatial_tile(hw, c, itemsize, byte_budget):
    """Lane width of one (C, tile_s) block.

    Returns either the full spatial extent (single block) or a multiple of 128 chosen so
    that one block -- including the sublane padding Mosaic applies when C is small -- is
    roughly `byte_budget` bytes.
    """
    sublane = max(1, 32 // itemsize)                     # 8 (f32), 16 (bf16), 32 (int8)
    padded_c = ((c + sublane - 1) // sublane) * sublane  # real VMEM rows per block
    if hw * padded_c * itemsize <= byte_budget:
        return hw                                        # whole image fits in one block
    lanes = byte_budget // (padded_c * itemsize)
    lanes = max(128, (lanes // 128) * 128)
    return min(lanes, hw)


def _channel_attention_kernel(x_ref, w1_ref, w2_ref, out_ref, acc_ref, *, hw):
    """One (batch, spatial-tile) grid step.

    x_ref   : (C, tile_s)  NCHW slab of one batch element, spatial on lanes, native dtype
    w1_ref  : (hidden, C)  first FC weight (PyTorch Linear layout: out, in), f32
    w2_ref  : (C, hidden)  second FC weight, f32
    out_ref : (C, 1)  f32  per-batch attention vector (resident across the spatial axis)
    acc_ref : (C, 1)  f32  running spatial sum (VMEM scratch, persists across grid steps)
    """
    s = pl.program_id(1)

    @pl.when(s == 0)
    def _init():
        acc_ref[...] = jnp.zeros_like(acc_ref)

    x = x_ref[...]                                      # (C, tile_s), native dtype
    tile_s = x.shape[-1]
    if hw % tile_s != 0:
        # cdiv grid: lanes past the end of the image are unspecified block padding on the
        # ragged last tile -> zero them before accumulating.
        lane = lax.broadcasted_iota(jnp.int32, x.shape, dimension=1)
        rem = hw - s * tile_s                           # >= tile_s except on the last tile
        x = jnp.where(lane < rem, x, jnp.zeros((), x.dtype))

    # Partial global-average-pool: up-cast to f32 during the reduction (bf16-safe).
    acc_ref[...] += jnp.sum(x, axis=-1, keepdims=True, dtype=jnp.float32)

    @pl.when(s == pl.num_programs(1) - 1)
    def _finalize():
        y = acc_ref[...] * (1.0 / hw)                                       # (C, 1) mean
        z = jnp.dot(w1_ref[...], y, preferred_element_type=jnp.float32)     # (hidden, 1)
        z = jnp.maximum(z, 0.0)
        a = jnp.dot(w2_ref[...], z, preferred_element_type=jnp.float32)     # (C, 1)
        out_ref[...] = 1.0 / (1.0 + jnp.exp(-a))        # exact sigmoid (cold path)


def channel_attention_sff(x_nchw, fc1_w, fc2_w, *, block_byte_budget=2 * 1024 * 1024):
    """ChannelAttentionSFF forward: (B, C, H, W) -> (B, C, 1, 1) attention weights."""
    B, C, H, W = x_nchw.shape
    hidden = fc1_w.shape[0]
    assert fc1_w.shape == (hidden, C) and fc2_w.shape == (C, hidden)

    HW = H * W
    x = x_nchw.reshape(B, C, HW)                 # free view of NCHW; spatial on lanes

    itemsize = jnp.dtype(x.dtype).itemsize
    tile_s = _choose_spatial_tile(HW, C, itemsize, block_byte_budget)
    n_tiles = pl.cdiv(HW, tile_s)

    out = pl.pallas_call(
        functools.partial(_channel_attention_kernel, hw=HW),
        out_shape=jax.ShapeDtypeStruct((B, C, 1), jnp.float32),
        grid=(B, n_tiles),
        in_specs=[
            pl.BlockSpec((None, C, tile_s), lambda b, s: (b, 0, s)),   # lane-dense spatial tile
            pl.BlockSpec((hidden, C), lambda b, s: (0, 0)),            # fc1 weight (grid-invariant)
            pl.BlockSpec((C, hidden), lambda b, s: (0, 0)),            # fc2 weight (grid-invariant)
        ],
        out_specs=pl.BlockSpec((None, C, 1), lambda b, s: (b, 0, 0)),
        scratch_shapes=[pltpu.VMEM((C, 1), jnp.float32)],
        compiler_params=pltpu.CompilerParams(
            dimension_semantics=("parallel", "arbitrary")),
    )(x, fc1_w.astype(jnp.float32), fc2_w.astype(jnp.float32))

    return out.reshape(B, C, 1, 1)


def channel_attention_ref(x_nchw, fc1_w, fc2_w):
    """Plain-JAX reference implementing the PyTorch module directly on NCHW input."""
    y = jnp.mean(x_nchw.astype(jnp.float32), axis=(2, 3))               # (B, C)
    z = jnp.maximum(y @ fc1_w.astype(jnp.float32).T, 0.0)               # Linear + ReLU
    a = jax.nn.sigmoid(z @ fc2_w.astype(jnp.float32).T)                 # Linear + Sigmoid
    return a[:, :, None, None]                                          # (B, C, 1, 1)


if __name__ == "__main__":
    def run_case(key, B, C, H, W, *, dtype=jnp.float32, reduction=16,
                 budget=2 * 1024 * 1024):
        hidden = max(1, C // reduction)
        k1, k2, k3 = jax.random.split(key, 3)
        x = jax.random.normal(k1, (B, C, H, W), jnp.float32).astype(dtype)
        fc1_w = 0.5 * jax.random.normal(k2, (hidden, C), jnp.float32)   # PyTorch Linear (out, in)
        fc2_w = 0.5 * jax.random.normal(k3, (C, hidden), jnp.float32)
        out = jax.block_until_ready(
            channel_attention_sff(x, fc1_w, fc2_w, block_byte_budget=budget))
        assert out.shape == (B, C, 1, 1) and out.dtype == jnp.float32
        ref = channel_attention_ref(x, fc1_w, fc2_w)
        assert jnp.allclose(out, ref, rtol=2e-3, atol=2e-3), \
            f"Pallas output mismatch vs reference for shape {(B, C, H, W)} dtype {dtype}"

    key = jax.random.PRNGKey(0)
    k_a, k_b, k_c = jax.random.split(key, 3)
    # Spec-sized example: single spatial tile, f32.
    run_case(k_a, 2, 4, 16, 16)
    # Multi-tile spatial accumulation, exactly divisible (small budget forces tiling).
    run_case(k_b, 2, 32, 64, 64, budget=64 * 1024)
    # bf16 input streamed natively + ragged last tile exercising the lane mask.
    run_case(k_c, 2, 16, 50, 37, dtype=jnp.bfloat16, budget=16 * 1024)
    print("KERNEL_OK")
</pallas_src>

<mosaic_0001>
module attributes {stable_mosaic.version = 11 : i64} {
  func.func @_channel_attention_kernel(%arg0: i32, %arg1: i32, %arg2: memref<1x4x256xf32, #tpu.memory_space<vmem>>, %arg3: memref<1x4xf32, #tpu.memory_space<vmem>>, %arg4: memref<4x1xf32, #tpu.memory_space<vmem>>, %arg5: memref<1x4x1xf32, #tpu.memory_space<vmem>>, %arg6: memref<4x1xf32, #tpu.memory_space<vmem>>) attributes {dimension_semantics = [#tpu.dimension_semantics<parallel>, #tpu.dimension_semantics<arbitrary>], iteration_bounds = array<i64: 2, 1>, scalar_prefetch = 0 : i64, scratch_operands = 1 : i64, tpu.core_type = #tpu.core_type<tc>, window_params = [{transform_indices = @transform_0, window_bounds = array<i64: 1, 4, 256>}, {pipeline_mode = #tpu.pipeline_mode<synchronous>, transform_indices = @transform_1, window_bounds = array<i64: 1, 4>}, {pipeline_mode = #tpu.pipeline_mode<synchronous>, transform_indices = @transform_2, window_bounds = array<i64: 4, 1>}, {transform_indices = @transform_3, window_bounds = array<i64: 1, 4, 1>}]} {
    %c0_i32 = arith.constant 0 : i32
    %0 = arith.cmpi eq, %arg1, %c0_i32 : i32
    %1 = arith.extui %0 : i1 to i32
    %c0_i32_0 = arith.constant 0 : i32
    %2 = arith.cmpi ne, %1, %c0_i32_0 : i32
    scf.if %2 {
      %cst_9 = arith.constant 0.000000e+00 : f32
      %13 = vector.broadcast %cst_9 : f32 to vector<4x1xf32>
      %c0_10 = arith.constant 0 : index
      %c0_11 = arith.constant 0 : index
      %14 = vector.load %arg6[%c0_10, %c0_11] : memref<4x1xf32, #tpu.memory_space<vmem>>, vector<4x1xf32>
      tpu.vector_store %arg6[%c0_10, %c0_11], %13 {strides = array<i32>} : memref<4x1xf32, #tpu.memory_space<vmem>>, vector<4x1xf32>,
    } else {
    }
    %c0 = arith.constant 0 : index
    %c0_1 = arith.constant 0 : index
    %c0_2 = arith.constant 0 : index
    %3 = vector.load %arg2[%c0, %c0_1, %c0_2] : memref<1x4x256xf32, #tpu.memory_space<vmem>>, vector<1x4x256xf32>
    %4 = vector.shape_cast %3 : vector<1x4x256xf32> to vector<4x256xf32>
    %c0_3 = arith.constant 0 : index
    %c0_4 = arith.constant 0 : index
    %5 = vector.load %arg6[%c0_3, %c0_4] : memref<4x1xf32, #tpu.memory_space<vmem>>, vector<4x1xf32>
    %cst = arith.constant dense<0.000000e+00> : vector<4xf32>
    %6 = vector.multi_reduction <add>, %4, %cst [1] : vector<4x256xf32> to vector<4xf32>
    %7 = vector.shape_cast %6 : vector<4xf32> to vector<4x1xf32>
    %8 = arith.addf %5, %7 : vector<4x1xf32>
    %c0_5 = arith.constant 0 : index
    %c0_6 = arith.constant 0 : index
    %9 = vector.load %arg6[%c0_5, %c0_6] : memref<4x1xf32, #tpu.memory_space<vmem>>, vector<4x1xf32>
    tpu.vector_store %arg6[%c0_5, %c0_6], %8 {strides = array<i32>} : memref<4x1xf32, #tpu.memory_space<vmem>>, vector<4x1xf32>,
    %c0_i32_7 = arith.constant 0 : i32
    %10 = arith.cmpi eq, %arg1, %c0_i32_7 : i32
    %11 = arith.extui %10 : i1 to i32
    %c0_i32_8 = arith.constant 0 : i32
    %12 = arith.cmpi ne, %11, %c0_i32_8 : i32
    scf.if %12 {
      %c0_9 = arith.constant 0 : index
      %c0_10 = arith.constant 0 : index
      %13 = vector.load %arg6[%c0_9, %c0_10] : memref<4x1xf32, #tpu.memory_space<vmem>>, vector<4x1xf32>
      %cst_11 = arith.constant 3.906250e-03 : f32
      %14 = vector.broadcast %cst_11 : f32 to vector<4x1xf32>
      %15 = arith.mulf %13, %14 : vector<4x1xf32>
      %c0_12 = arith.constant 0 : index
      %c0_13 = arith.constant 0 : index
      %16 = vector.load %arg3[%c0_12, %c0_13] : memref<1x4xf32, #tpu.memory_space<vmem>>, vector<1x4xf32>
      %cst_14 = arith.constant dense<0.000000e+00> : vector<1x1xf32>
      %17 = tpu.matmul %16, %15, %cst_14 {dimension_numbers = #tpu.dot_dimension_numbers<[1], [0], [0], [1], [0, 0, 1, 1], [], []>} : vector<1x4xf32>, vector<4x1xf32>, vector<1x1xf32> -> vector<1x1xf32>
      %cst_15 = arith.constant 0.000000e+00 : f32
      %18 = vector.broadcast %cst_15 : f32 to vector<1x1xf32>
      %19 = arith.maximumf %17, %18 : vector<1x1xf32>
      %c0_16 = arith.constant 0 : index
      %c0_17 = arith.constant 0 : index
      %20 = vector.load %arg4[%c0_16, %c0_17] : memref<4x1xf32, #tpu.memory_space<vmem>>, vector<4x1xf32>
      %cst_18 = arith.constant dense<0.000000e+00> : vector<4x1xf32>
      %21 = tpu.matmul %20, %19, %cst_18 {dimension_numbers = #tpu.dot_dimension_numbers<[1], [0], [0], [1], [0, 0, 1, 1], [], []>} : vector<4x1xf32>, vector<1x1xf32>, vector<4x1xf32> -> vector<4x1xf32>
      %cst_19 = arith.constant 0.000000e+00 : f32
      %22 = vector.broadcast %cst_19 : f32 to vector<4x1xf32>
      %23 = arith.subf %22, %21 : vector<4x1xf32>
      %24 = math.exp %23 : vector<4x1xf32>
      %cst_20 = arith.constant 1.000000e+00 : f32
      %25 = vector.broadcast %cst_20 : f32 to vector<4x1xf32>
      %26 = arith.addf %25, %24 : vector<4x1xf32>
      %cst_21 = arith.constant 1.000000e+00 : f32
      %27 = vector.broadcast %cst_21 : f32 to vector<4x1xf32>
      %28 = arith.divf %27, %26 : vector<4x1xf32>
      %c0_22 = arith.constant 0 : index
      %c0_23 = arith.constant 0 : index
      %c0_24 = arith.constant 0 : index
      %29 = vector.load %arg5[%c0_22, %c0_23, %c0_24] : memref<1x4x1xf32, #tpu.memory_space<vmem>>, vector<1x4x1xf32>
      %30 = vector.shape_cast %29 : vector<1x4x1xf32> to vector<4x1xf32>
      %31 = vector.shape_cast %28 : vector<4x1xf32> to vector<1x4x1xf32>
      tpu.vector_store %arg5[%c0_22, %c0_23, %c0_24], %31 {strides = array<i32>} : memref<1x4x1xf32, #tpu.memory_space<vmem>>, vector<1x4x1xf32>,
    } else {
    }
    return
  }
  func.func @transform_0(%arg0: i32, %arg1: i32) -> (i32, i32, i32) {
    %c0_i32 = arith.constant 0 : i32
    %c0_i32_0 = arith.constant 0 : i32
    return %arg0, %c0_i32, %arg1 : i32, i32, i32
  }
  func.func @transform_1(%arg0: i32, %arg1: i32) -> (i32, i32) {
    %c0_i32 = arith.constant 0 : i32
    %c0_i32_0 = arith.constant 0 : i32
    %c0_i32_1 = arith.constant 0 : i32
    return %c0_i32, %c0_i32_0 : i32, i32
  }
  func.func @transform_2(%arg0: i32, %arg1: i32) -> (i32, i32) {
    %c0_i32 = arith.constant 0 : i32
    %c0_i32_0 = arith.constant 0 : i32
    %c0_i32_1 = arith.constant 0 : i32
    return %c0_i32, %c0_i32_0 : i32, i32
  }
  func.func @transform_3(%arg0: i32, %arg1: i32) -> (i32, i32, i32) {
    %c0_i32 = arith.constant 0 : i32
    %c0_i32_0 = arith.constant 0 : i32
    %c0_i32_1 = arith.constant 0 : i32
    return %arg0, %c0_i32, %c0_i32_0 : i32, i32, i32
  }
}

</mosaic_0001>

<llo_original>
// kernel: tpu_custom_call.1
$region0: #{tpu_custom_call.1}
  #allocation0 [shape = 'u32[]', space=smem, size = 0x4, offset = 0x4, fixed_abs, tag = 'smem constant byte address 0x4 - core index']
  #allocation1 [shape = 'u32[72,128]{1,0:T(1,128)}', space=vmem, size = 0x9000, scoped, tag = 'internal scratch']
  #allocation2 [shape = 'f32[4,1]{1,0:T(4,128)}', space=vmem, size = 0x800, scoped, tag = 'scratch operand']
  %s0 = inlined_call_operand.hbm [shape: f32[2,4,256], index: 0, kind: input, shape index: {}]
  %s1 = inlined_call_operand.vmem [shape: f32[1,4], index: 1, kind: input, shape index: {}]
  %s2 = inlined_call_operand.vmem [shape: f32[4,1], index: 2, kind: input, shape index: {}]
  %s3 = inlined_call_operand.vmem [shape: f32[2,4,1], index: 3, kind: output, shape index: {}]
  %s4 = sld [smem:[#allocation0]]
  $region57: #{tpu_custom_call.1} parent=0
    _
  %s6 = ssub.s32 1, %s4
  %s7 = scalar_select 0, %s6, %s4
  $region1: #{tpu_custom_call.1} parent=0
    #allocation3 [shape = 'u8[8192]{0}', space=vmem, size = 0x2000, scoped, tag = 'input window, operand 0']
    #allocation4 [shape = 's32[2]{0}', space=sflag, size = 0x8, scoped, tag = 'scoped memory for tpu_custom_call.1']
    %8 = vsyncpa [#allocation4], 0
    %s9 = scalar_lea.sflag [#allocation4], 1
    %10 = vsyncpa %s9, 0
    loop: start=0, step=1, limit=4
    $region2: #{tpu_custom_call.1} parent=1 // loop_pre_header
      _
    $region3: #{tpu_custom_call.1} parent=1 // loop_header
      %s12 = sphi 0, %s16
      %p13 = scmp.ge.s32.totalorder %s12, 4
      %s19 = sphi 0, %s31
      %s20 = sphi 0, %s27
      %s21 = sphi 0, %s19
      %s22 = sphi 0, %s20
      %s23 = sphi 0, %s21
      %s24 = sphi 0, %s22
      %s36 = sphi 0, %s38
      %s39 = sphi 0, %s36
      %s40 = sphi 0, %s39
      %s56 = sphi 0, %s40
      %s60 = sphi 0, %s60
      %s62 = sphi 0, %s60
      %s63 = sphi 0, %s62
      %s77 = sphi 0, %s63
      %s81 = sphi 0, %s81
      %s83 = sphi 0, %s81
      %s84 = sphi 0, %s83
      %s98 = sphi 0, %s84
      %s104 = sphi 0, %s106
      %s107 = sphi 0, %s104
      %s108 = sphi 0, %s107
      %s124 = sphi 0, %s108
    $region4: #{tpu_custom_call.1} parent=1 // loop_header_branch
      %15 = sbr.rel (%p13) target = $region8
    $region5: #{tpu_custom_call.1} parent=1 // loop_body
      %s17 = ssub.s32 %s12, 1
      %s18 = ssub.s32 %s12, 2
      %s25 = sadd.s32 1, %s20
      %p26 = scmp.ge.s32.totalorder %s25, 1
      %s27 = scalar_select %p26, 0, %s25
      %s28 = sadd.s32 1, %s19
      %s29 = scalar_select %p26, %s28, %s19
      %p30 = scmp.ge.s32.totalorder %s29, 2
      %s31 = scalar_select %p30, 0, %s29
      %s32 = ssub.s32 %s19, %s31
      %s33 = ssub.s32 %s20, %s27
      %s34 = sor.u32 %s32, %s33
      %p35 = scmp.eq.s32.totalorder %s34, 0
      %s37 = sadd.s32 %s36, 1
      %s38 = scalar_select %p35, %s36, %s37
      %p41 = pneg %p35
      %p42 = scmp.eq.s32.totalorder %s12, 1
      %p43 = por %p41, %p42
      %p44 = scmp.ne.s32.totalorder %s36, %s39
      %p45 = scmp.eq.s32.totalorder %s12, 0
      %p46 = por %p44, %p45
      %p47 = scmp.ne.s32.totalorder %s36, %s39
      %p48 = scmp.eq.s32.totalorder %s17, 1
      %p49 = por %p47, %p48
      %p50 = scmp.ne.s32.totalorder %s39, %s40
      %p51 = scmp.eq.s32.totalorder %s17, 0
      %p52 = por %p50, %p51
      %p53 = scmp.ne.s32.totalorder %s39, %s40
      %p54 = scmp.eq.s32.totalorder %s18, 1
      %p55 = por %p53, %p54
      %p57 = scmp.ne.s32.totalorder %s40, %s56
      %p58 = scmp.eq.s32.totalorder %s18, 0
      %p59 = por %p57, %p58
      %s61 = sadd.s32 %s60, 1
      %p64 = scmp.eq.s32.totalorder %s12, 1
      %p65 = scmp.ne.s32.totalorder %s60, %s62
      %p66 = scmp.eq.s32.totalorder %s12, 0
      %p67 = por %p65, %p66
      %p68 = scmp.ne.s32.totalorder %s60, %s62
      %p69 = scmp.eq.s32.totalorder %s17, 1
      %p70 = por %p68, %p69
      %p71 = scmp.ne.s32.totalorder %s62, %s63
      %p72 = scmp.eq.s32.totalorder %s17, 0
      %p73 = por %p71, %p72
      %p74 = scmp.ne.s32.totalorder %s62, %s63
      %p75 = scmp.eq.s32.totalorder %s18, 1
      %p76 = por %p74, %p75
      %p78 = scmp.ne.s32.totalorder %s63, %s77
      %p79 = scmp.eq.s32.totalorder %s18, 0
      %p80 = por %p78, %p79
      %s82 = sadd.s32 %s81, 1
      %p85 = scmp.eq.s32.totalorder %s12, 1
      %p86 = scmp.ne.s32.totalorder %s81, %s83
      %p87 = scmp.eq.s32.totalorder %s12, 0
      %p88 = por %p86, %p87
      %p89 = scmp.ne.s32.totalorder %s81, %s83
      %p90 = scmp.eq.s32.totalorder %s17, 1
      %p91 = por %p89, %p90
      %p92 = scmp.ne.s32.totalorder %s83, %s84
      %p93 = scmp.eq.s32.totalorder %s17, 0
      %p94 = por %p92, %p93
      %p95 = scmp.ne.s32.totalorder %s83, %s84
      %p96 = scmp.eq.s32.totalorder %s18, 1
      %p97 = por %p95, %p96
      %p99 = scmp.ne.s32.totalorder %s84, %s98
      %p100 = scmp.eq.s32.totalorder %s18, 0
      %p101 = por %p99, %p100
      %s102 = ssub.s32 %s19, %s31
      %p103 = scmp.eq.s32.totalorder %s102, 0
      %s105 = sadd.s32 %s104, 1
      %s106 = scalar_select %p103, %s104, %s105
      %p109 = pneg %p103
      %p110 = scmp.eq.s32.totalorder %s12, 1
      %p111 = por %p109, %p110
      %p112 = scmp.ne.s32.totalorder %s104, %s107
      %p113 = scmp.eq.s32.totalorder %s12, 0
      %p114 = por %p112, %p113
      %p115 = scmp.ne.s32.totalorder %s104, %s107
      %p116 = scmp.eq.s32.totalorder %s17, 1
      %p117 = por %p115, %p116
      %p118 = scmp.ne.s32.totalorder %s107, %s108
      %p119 = scmp.eq.s32.totalorder %s17, 0
      %p120 = por %p118, %p119
      %p121 = scmp.ne.s32.totalorder %s107, %s108
      %p122 = scmp.eq.s32.totalorder %s18, 1
      %p123 = por %p121, %p122
      %p125 = scmp.ne.s32.totalorder %s108, %s124
      %p126 = scmp.eq.s32.totalorder %s18, 0
      %p127 = por %p125, %p126
      %p128 = scmp.le.s32.totalorder 1, %s12
      %p129 = scmp.lt.s32.totalorder %s12, 3
      %p130 = pnand %p128, %p129
      %p131 = pneg %p130
      // Predicated region
      $region9: #{tpu_custom_call.1} parent=5 // pred_check
        _
      $region10: #{tpu_custom_call.1} parent=5 // pred_check_branch
        %133 = sbr.rel (%p130) target = $region12
      $region11: #{tpu_custom_call.1} parent=5 // pred_region
        %s134 = ssub.s32 %s12, 1
        // Predicated region
        $region13: #{tpu_custom_call.1} parent=11 // pred_check
          %p135 = pneg %p73
        $region14: #{tpu_custom_call.1} parent=11 // pred_check_branch
          %137 = sbr.rel (%p135) target = $region16
        $region15: #{tpu_custom_call.1} parent=11 // pred_region
          _
        $region16: #{tpu_custom_call.1} parent=11 // pred_fallthru
          _
        // Predicated region
        $region17: #{tpu_custom_call.1} parent=11 // pred_check
          %p138 = pneg %p94
        $region18: #{tpu_custom_call.1} parent=11 // pred_check_branch
          %140 = sbr.rel (%p138) target = $region20
        $region19: #{tpu_custom_call.1} parent=11 // pred_region
          _
        $region20: #{tpu_custom_call.1} parent=11 // pred_fallthru
          _
      $region12: #{tpu_custom_call.1} parent=5 // pred_fallthru
        _
      %p141 = scmp.lt.s32.totalorder %s12, 2
      // Predicated region
      $region21: #{tpu_custom_call.1} parent=5 // pred_check
        %p142 = pneg %p141
      $region22: #{tpu_custom_call.1} parent=5 // pred_check_branch
        %144 = sbr.rel (%p142) target = $region24
      $region23: #{tpu_custom_call.1} parent=5 // pred_region
        // Predicated region
        $region25: #{tpu_custom_call.1} parent=23 // pred_check
          %p145 = pneg %p46
        $region26: #{tpu_custom_call.1} parent=23 // pred_check_branch
          %147 = sbr.rel (%p145) target = $region28
        $region27: #{tpu_custom_call.1} parent=23 // pred_region
          %s148 = sand.u32 %s36, 1
          %s149 = scalar_lea.sflag [#allocation4], %s148
          %s150 = sand.u32 %s36, 1
          %s151 = smul.addr %s150, 8
          %s152 = scalar_lea.vmem [#allocation3], %s151
          %s153 = smul.u32 2, %s20
          %155 = vsyncadd %s149, 0
          %s156 = smul.addr %s19, 2
          %s157 = sadd.s32 %s153, %s156
          %s158 = smul.addr %s157, 4
          %s159 = scalar_lea.hbm %s0, %s158
          %s161 = sshll.u32 %s159, 4
          %s162 = int_to_ptr.hbm [resolvable:$true] %s161
          %s163 = sshll.u32 %s152, 4
          %s164 = int_to_ptr.vmem [resolvable:$true] %s163
          %166 = dma.hbm_to_vmem [thread:$0]  %s162, 128, %s164, %s149
        $region28: #{tpu_custom_call.1} parent=23 // pred_fallthru
          _
      $region24: #{tpu_custom_call.1} parent=5 // pred_fallthru
        _
      %p167 = scmp.le.s32.totalorder 1, %s12
      %p168 = scmp.lt.s32.totalorder %s12, 3
      %p169 = pnand %p167, %p168
      %p170 = pneg %p169
      // Predicated region
      $region29: #{tpu_custom_call.1} parent=5 // pred_check
        _
      $region30: #{tpu_custom_call.1} parent=5 // pred_check_branch
        %172 = sbr.rel (%p169) target = $region32
      $region31: #{tpu_custom_call.1} parent=5 // pred_region
        %s173 = ssub.s32 %s12, 1
        %s174 = sand.u32 %s39, 1
        %s175 = scalar_lea.sflag [#allocation4], %s174
        %s176 = sand.u32 %s39, 1
        %s177 = smul.addr %s176, 8
        %s178 = scalar_lea.vmem [#allocation3], %s177
        // Predicated region
        $region33: #{tpu_custom_call.1} parent=31 // pred_check
          %p179 = pneg %p52
        $region34: #{tpu_custom_call.1} parent=31 // pred_check_branch
          %181 = sbr.rel (%p179) target = $region36
        $region35: #{tpu_custom_call.1} parent=31 // pred_region
          %183 = dma.done %s175, 128
        $region36: #{tpu_custom_call.1} parent=31 // pred_fallthru
          _
        %s184 = sand.u32 %s39, 1
        %s185 = scalar_lea.sflag [#allocation4], %s184
        %s186 = sand.u32 %s39, 1
        %s187 = smul.addr %s186, 8
        %s188 = scalar_lea.vmem [#allocation3], %s187
        %p189 = pneg %p52
        %p190 = pneg %p49
        %p191 = pneg %p73
        %p192 = pneg %p70
        %p193 = pneg %p94
        %p194 = pneg %p91
        %p195 = pneg %p120
        %p196 = pneg %p117
        %p197 = scmp.lt.s32.totalorder %s21, 1
        %s198 = scalar_select %p197, %s21, 1
        %s199 = smul.addr %s198, 4
        %s200 = scalar_lea.vmem %s3, %s199
        %s201 = smul.u32 2, %s22
        %p202 = scmp.lt.s32.totalorder %s21, 1
        %s203 = scalar_select %p202, %s21, 1
        %s204 = smul.addr %s203, 4
        %s205 = scalar_lea.vmem %s3, %s204
        %p206 = scmp.eq.s32.totalorder %s22, 0
        // Predicated region
        $region37: #{tpu_custom_call.1} parent=31 // pred_check
          %p207 = pneg %p206
        $region38: #{tpu_custom_call.1} parent=31 // pred_check_branch
          %209 = sbr.rel (%p207) target = $region40
        $region39: #{tpu_custom_call.1} parent=31 // pred_region
          %vm210 = vcmask 3072
          %211 = vst.msk [vmem:[#allocation2] sm:$0xf] %vm210, 0.0
        $region40: #{tpu_custom_call.1} parent=31 // pred_fallthru
          _
        %v212 = vld [vmem:[%s178] sm:$0xff]
        %v213 = vld [vmem:[#allocation2] sm:$0xf]
        %215 = vst [vmem:[#allocation1] ss:$2 sm:$0xff] %v212
        %v216 = vld.sshfl [vmem:[#allocation1] sm:$0xff pattern:$0x75316420]
        %v217 = vld.sshfl [vmem:[#allocation1 + $0x8] sm:$0xff pattern:$0x75316420]
        %vm220 = vcmask 1043456
        %v221 = vsel %vm220, %v216, 0.0
        %v222 = vsel %vm220, %v217, 0.0
        %v223 = vadd.f32 %v221, %v222
        %224 = vadd.xlane.f32.xlu0 %v223
        %v225 = vpop.xlane.xlu0 %224
        %v226 = vadd.f32 %v213, %v225
        %vm227 = vcmask 3072
        %228 = vst.msk [vmem:[#allocation2] sm:$0xf] %vm227, %v226
        // Predicated region
        $region41: #{tpu_custom_call.1} parent=31 // pred_check
          %p229 = pneg %p206
        $region42: #{tpu_custom_call.1} parent=31 // pred_check_branch
          %231 = sbr.rel (%p229) target = $region44
        $region43: #{tpu_custom_call.1} parent=31 // pred_region
          %v232 = vld [vmem:[#allocation2] sm:$0xf]
          %v233 = vmul.f32 %v232, 0.00390625
          %v234 = vld [vmem:[%s1] sm:$0x1]
          %vm235 = vcmask 31744
          %v237 = vsel %vm235, %v234, 0
          %v240 = vsel %vm220, %v233, 0
          %242 = vmatpush.msra.mxu0 0.0
          %243 = vmatpush.msra.mxu0 0.0
          %244 = vmatpush.msra.mxu0 0.0
          %245 = vmatpush.msra.mxu0 0.0
          %246 = vmatpush.msra.mxu0 0.0
          %247 = vmatpush.msra.mxu0 0.0
          %248 = vmatpush.msra.mxu0 0.0
          %249 = vmatpush.msra.mxu0 0.0
          %250 = vmatpush.msra.mxu0 0.0
          %251 = vmatpush.msra.mxu0 0.0
          %252 = vmatpush.msra.mxu0 0.0
          %253 = vmatpush.msra.mxu0 0.0
          %254 = vmatpush.msra.mxu0 0.0
          %255 = vmatpush.msra.mxu0 0.0
          %256 = vmatpush.msra.mxu0 0.0
          %257 = vmatpush.msra.mxu0 %v240
          %258 = vmatmul.f32.gmra.mxu0 %v237
          %v259 = vpop.f32.mrf.mxu0
          %v260 = vadd.f32 0.0, %v259
          %261 = vdwg.mxu0
          %v262 = vmax.f32 %v260, 0.0
          %v263 = vld [vmem:[%s2] sm:$0xf]
          %vm264 = vcmask 7168
          %v266 = vsel %vm264, %v263, 0
          %vm268 = vcmask 1040384
          %v270 = vsel %vm268, %v262, 0
          %272 = vmatpush.msra.mxu0 0.0
          %273 = vmatpush.msra.mxu0 0.0
          %274 = vmatpush.msra.mxu0 0.0
          %275 = vmatpush.msra.mxu0 0.0
          %276 = vmatpush.msra.mxu0 0.0
          %277 = vmatpush.msra.mxu0 0.0
          %278 = vmatpush.msra.mxu0 0.0
          %279 = vmatpush.msra.mxu0 0.0
          %280 = vmatpush.msra.mxu0 0.0
          %281 = vmatpush.msra.mxu0 0.0
          %282 = vmatpush.msra.mxu0 0.0
          %283 = vmatpush.msra.mxu0 0.0
          %284 = vmatpush.msra.mxu0 0.0
          %285 = vmatpush.msra.mxu0 0.0
          %286 = vmatpush.msra.mxu0 0.0
          %287 = vmatpush.msra.mxu0 %v270
          %288 = vmatmul.f32.gmra.mxu0 %v266
          %v289 = vpop.f32.mrf.mxu0
          %v290 = vadd.f32 0.0, %v289
          %291 = vdwg.mxu0
          %v292 = vsub.f32 0.0, %v290
          %v293 = vmul.f32 %v292, 1.442695
          %v294 = vpow.pop %v293
          %v295 = vadd.f32 %v294, 1.0
          %v296 = vrcp.pop %v295
          %v297 = vmul.f32 %v295, %v296
          %v298 = vsub.f32 1.0, %v297
          %v299 = vmul.f32 %v296, %v298
          %v300 = vadd.f32 %v296, %v299
          %vm301 = vweird.f32 %v295
          %vm302 = vweird.f32 %v296
          %vm303 = vmor %vm301, %vm302
          %v304 = vsel %vm303, %v296, %v300
          %v305 = vand.u32 2147483647, %v295
          %vm306 = vcmp.eq.f32.partialorder %v305, 8.507059e+37
          %v307 = vand.u32 %v295, 2147483648
          %v308 = vor.u32 1.1754944e-38, %v307
          %v309 = vsel %vm306, %v308, %v304
          %v310 = vmul.f32 1.0, %v309
          %311 = vst.msk [vmem:[%s205] sm:$0xf] %vm227, %v310
        $region44: #{tpu_custom_call.1} parent=31 // pred_fallthru
          _
        %p312 = scmp.lt.s32.totalorder %s21, 1
        %s313 = scalar_select %p312, %s21, 1
        %s314 = smul.addr %s313, 4
        %s315 = scalar_lea.vmem %s3, %s314
        // Predicated region
        $region45: #{tpu_custom_call.1} parent=31 // pred_check
          %p316 = pneg %p117
        $region46: #{tpu_custom_call.1} parent=31 // pred_check_branch
          %318 = sbr.rel (%p316) target = $region48
        $region47: #{tpu_custom_call.1} parent=31 // pred_region
          _
        $region48: #{tpu_custom_call.1} parent=31 // pred_fallthru
          _
      $region32: #{tpu_custom_call.1} parent=5 // pred_fallthru
        _
      %p319 = scmp.le.s32.totalorder 2, %s12
      // Predicated region
      $region49: #{tpu_custom_call.1} parent=5 // pred_check
        %p320 = pneg %p319
      $region50: #{tpu_custom_call.1} parent=5 // pred_check_branch
        %322 = sbr.rel (%p320) target = $region52
      $region51: #{tpu_custom_call.1} parent=5 // pred_region
        %s323 = ssub.s32 %s12, 2
        // Predicated region
        $region53: #{tpu_custom_call.1} parent=51 // pred_check
          %p324 = pneg %p123
        $region54: #{tpu_custom_call.1} parent=51 // pred_check_branch
          %326 = sbr.rel (%p324) target = $region56
        $region55: #{tpu_custom_call.1} parent=51 // pred_region
          %p327 = scmp.lt.s32.totalorder %s23, 1
          %s328 = scalar_select %p327, %s23, 1
          %s329 = smul.addr %s328, 4
          %s330 = scalar_lea.vmem %s3, %s329
        $region56: #{tpu_custom_call.1} parent=51 // pred_fallthru
          _
      $region52: #{tpu_custom_call.1} parent=5 // pred_fallthru
        _
    $region6: #{tpu_custom_call.1} parent=1 // loop_footer
      %s16 = sadd.s32 1, %s12
    $region7: #{tpu_custom_call.1} parent=1 // loop_footer_branch
      %11 = sbr.rel target = $region3
    $region8: #{tpu_custom_call.1} parent=1 // loop_exit
      _
    %331 = vsyncpa [#allocation4], 1
    %s332 = scalar_lea.sflag [#allocation4], 1
    %333 = vsyncpa %s332, 1

</llo_original>
